<compile_context>
chip_gen: v7x
topology: tpu7x:2x2x1
jax: 0.10.0
libtpu: 0.0.40
codegen_flags: <defaults>
</compile_context>

<pallas_src>
import functools

import jax
import jax.numpy as jnp
from jax.experimental import pallas as pl
from jax.experimental.pallas import tpu as pltpu


def _mlp_kernel(x_ref, w1_ref, c1_ref, w2_ref, c2_ref, w3_ref, b3_ref, o_ref):
    # ---- layer 1: Linear + folded BatchNorm -> ReLU ----------------------
    h1 = jnp.dot(x_ref[...], w1_ref[...],
                 preferred_element_type=jnp.float32) + c1_ref[...]
    h1 = jnp.maximum(h1, 0.0)
    # Dropout(0.5): identity in eval mode.

    # ---- layer 2: Linear + folded BatchNorm -> ReLU ----------------------
    h2 = jnp.dot(h1, w2_ref[...],
                 preferred_element_type=jnp.float32) + c2_ref[...]
    h2 = jnp.maximum(h2, 0.0)
    # Dropout(0.5): identity in eval mode.

    # ---- layer 3: 64 -> 1 projection as VPU mul + lane reduce, then sigmoid
    logits = jnp.sum(h2 * w3_ref[...], axis=-1, keepdims=True) + b3_ref[...]
    o_ref[...] = jax.nn.sigmoid(logits)


def _round_up(n, m):
    return ((n + m - 1) // m) * m


@jax.jit
def contest_classifier_forward(x, params):
    """Full ContestClassifier forward pass (eval mode) via one pallas_call.

    x: (B, D) float32
    params: dict with Linear weights/biases and folded-BN scale/shift (f32).
    """
    B, D = x.shape

    # ---- fold BatchNorm (eval) into the Linear weights (wrapper-side) ----
    w1f = params["w1"] * params["bn1_scale"]                       # (D, 128)
    c1 = params["b1"] * params["bn1_scale"] + params["bn1_shift"]  # (1, 128)
    w2f = params["w2"] * params["bn2_scale"]                       # (128, 64)
    c2 = params["b2"] * params["bn2_scale"] + params["bn2_shift"]  # (1, 64)
    w3row = params["w3"].reshape(1, 64)                            # (1, 64)
    b3 = params["b3"].reshape(1, 1)                                # (1, 1)

    # ---- batch tiling: pad B to a multiple of the tile, stream tiles ------
    TB = min(512, _round_up(B, 8))          # sublane-aligned, VMEM-friendly
    B_pad = _round_up(B, TB)
    if B_pad != B:
        x = jnp.pad(x, ((0, B_pad - B), (0, 0)))
    grid = (B_pad // TB,)

    const2d = lambda i: (0, 0)              # weights: resident, DMA'd once

    out = pl.pallas_call(
        _mlp_kernel,
        out_shape=jax.ShapeDtypeStruct((B_pad, 1), jnp.float32),
        grid=grid,
        in_specs=[
            pl.BlockSpec((TB, D), lambda i: (i, 0)),      # x tile (pipelined)
            pl.BlockSpec((D, 128), const2d),              # W1'
            pl.BlockSpec((1, 128), const2d),              # c1
            pl.BlockSpec((128, 64), const2d),             # W2'
            pl.BlockSpec((1, 64), const2d),               # c2
            pl.BlockSpec((1, 64), const2d),               # w3 row
            pl.BlockSpec((1, 1), const2d),                # b3
        ],
        out_specs=pl.BlockSpec((TB, 1), lambda i: (i, 0)),
        compiler_params=pltpu.CompilerParams(
            dimension_semantics=("parallel",),
            vmem_limit_bytes=64 << 20,
        ),
    )(x, w1f, c1, w2f, c2, w3row, b3)

    return out[:B]


def make_params(input_dim, key):
    """Deterministic synthetic parameters matching the PyTorch module shapes."""
    ks = jax.random.split(key, 10)

    def lin(kw, kb, fan_in, fan_out):
        # PyTorch stores Linear weight as (out, in); we keep (in, out) so the
        # kernel computes x @ W + b directly.
        bound = 1.0 / jnp.sqrt(fan_in)
        w = jax.random.uniform(kw, (fan_in, fan_out), jnp.float32, -bound, bound)
        b = jax.random.uniform(kb, (1, fan_out), jnp.float32, -bound, bound)
        return w, b

    w1, b1 = lin(ks[0], ks[1], input_dim, 128)
    w2, b2 = lin(ks[2], ks[3], 128, 64)
    w3, b3 = lin(ks[4], ks[5], 64, 1)

    def bn_fold(kg, kb, n, eps=1e-5):
        gamma = 1.0 + 0.1 * jax.random.normal(kg, (1, n), jnp.float32)
        beta = 0.1 * jax.random.normal(kb, (1, n), jnp.float32)
        running_mean = jnp.zeros((1, n), jnp.float32)
        running_var = jnp.ones((1, n), jnp.float32)
        scale = gamma / jnp.sqrt(running_var + eps)
        shift = beta - running_mean * scale
        return scale, shift

    bn1_scale, bn1_shift = bn_fold(ks[6], ks[7], 128)
    bn2_scale, bn2_shift = bn_fold(ks[8], ks[9], 64)

    return dict(w1=w1, b1=b1, bn1_scale=bn1_scale, bn1_shift=bn1_shift,
                w2=w2, b2=b2, bn2_scale=bn2_scale, bn2_shift=bn2_shift,
                w3=w3, b3=b3)


def reference_forward(x, p):
    """Pure-JAX reference (eval-mode semantics) for correctness checking."""
    h = jnp.maximum((x @ p["w1"] + p["b1"]) * p["bn1_scale"] + p["bn1_shift"], 0.0)
    h = jnp.maximum((h @ p["w2"] + p["b2"]) * p["bn2_scale"] + p["bn2_shift"], 0.0)
    return jax.nn.sigmoid(h @ p["w3"] + p["b3"])


# TODO(synk): training-mode Dropout and BatchNorm batch-statistic updates are
# not implemented; this kernel implements the inference (eval) forward pass.

if __name__ == "__main__":
    key = jax.random.PRNGKey(0)
    k_x, k_p = jax.random.split(key)

    batch, input_dim = 8, 32
    x = jax.random.normal(k_x, (batch, input_dim), jnp.float32)
    params = make_params(input_dim, k_p)

    out = contest_classifier_forward(x, params)
    out = jax.block_until_ready(out)

    ref = reference_forward(x, params)
    assert out.shape == (batch, 1), out.shape
    assert jnp.allclose(out, ref, atol=1e-5, rtol=1e-5), (out, ref)

    print("KERNEL_OK")
</pallas_src>

<mosaic_0001>
module attributes {stable_mosaic.version = 11 : i64} {
  func.func @_mlp_kernel(%arg0: i32, %arg1: memref<8x32xf32, #tpu.memory_space<vmem>>, %arg2: memref<32x128xf32, #tpu.memory_space<vmem>>, %arg3: memref<1x128xf32, #tpu.memory_space<vmem>>, %arg4: memref<128x64xf32, #tpu.memory_space<vmem>>, %arg5: memref<1x64xf32, #tpu.memory_space<vmem>>, %arg6: memref<1x64xf32, #tpu.memory_space<vmem>>, %arg7: memref<1x1xf32, #tpu.memory_space<vmem>>, %arg8: memref<8x1xf32, #tpu.memory_space<vmem>>) attributes {dimension_semantics = [#tpu.dimension_semantics<parallel>], iteration_bounds = array<i64: 1>, scalar_prefetch = 0 : i64, scratch_operands = 0 : i64, tpu.core_type = #tpu.core_type<tc>, window_params = [{transform_indices = @transform_0, window_bounds = array<i64: 8, 32>}, {pipeline_mode = #tpu.pipeline_mode<synchronous>, transform_indices = @transform_1, window_bounds = array<i64: 32, 128>}, {pipeline_mode = #tpu.pipeline_mode<synchronous>, transform_indices = @transform_2, window_bounds = array<i64: 1, 128>}, {pipeline_mode = #tpu.pipeline_mode<synchronous>, transform_indices = @transform_3, window_bounds = array<i64: 128, 64>}, {pipeline_mode = #tpu.pipeline_mode<synchronous>, transform_indices = @transform_4, window_bounds = array<i64: 1, 64>}, {pipeline_mode = #tpu.pipeline_mode<synchronous>, transform_indices = @transform_5, window_bounds = array<i64: 1, 64>}, {pipeline_mode = #tpu.pipeline_mode<synchronous>, transform_indices = @transform_6, window_bounds = array<i64: 1, 1>}, {transform_indices = @transform_7, window_bounds = array<i64: 8, 1>}]} {
    %c0 = arith.constant 0 : index
    %c0_0 = arith.constant 0 : index
    %0 = vector.load %arg1[%c0, %c0_0] : memref<8x32xf32, #tpu.memory_space<vmem>>, vector<8x32xf32>
    %c0_1 = arith.constant 0 : index
    %c0_2 = arith.constant 0 : index
    %1 = vector.load %arg2[%c0_1, %c0_2] : memref<32x128xf32, #tpu.memory_space<vmem>>, vector<32x128xf32>
    %cst = arith.constant dense<0.000000e+00> : vector<8x128xf32>
    %2 = tpu.matmul %0, %1, %cst {dimension_numbers = #tpu.dot_dimension_numbers<[1], [0], [0], [1], [0, 0, 1, 1], [], []>} : vector<8x32xf32>, vector<32x128xf32>, vector<8x128xf32> -> vector<8x128xf32>
    %c0_3 = arith.constant 0 : index
    %c0_4 = arith.constant 0 : index
    %3 = vector.load %arg3[%c0_3, %c0_4] : memref<1x128xf32, #tpu.memory_space<vmem>>, vector<1x128xf32>
    %4 = vector.broadcast %3 : vector<1x128xf32> to vector<8x128xf32>
    %5 = arith.addf %2, %4 : vector<8x128xf32>
    %cst_5 = arith.constant 0.000000e+00 : f32
    %6 = vector.broadcast %cst_5 : f32 to vector<8x128xf32>
    %7 = arith.maximumf %5, %6 : vector<8x128xf32>
    %c0_6 = arith.constant 0 : index
    %c0_7 = arith.constant 0 : index
    %8 = vector.load %arg4[%c0_6, %c0_7] : memref<128x64xf32, #tpu.memory_space<vmem>>, vector<128x64xf32>
    %cst_8 = arith.constant dense<0.000000e+00> : vector<8x64xf32>
    %9 = tpu.matmul %7, %8, %cst_8 {dimension_numbers = #tpu.dot_dimension_numbers<[1], [0], [0], [1], [0, 0, 1, 1], [], []>} : vector<8x128xf32>, vector<128x64xf32>, vector<8x64xf32> -> vector<8x64xf32>
    %c0_9 = arith.constant 0 : index
    %c0_10 = arith.constant 0 : index
    %10 = vector.load %arg5[%c0_9, %c0_10] : memref<1x64xf32, #tpu.memory_space<vmem>>, vector<1x64xf32>
    %11 = vector.broadcast %10 : vector<1x64xf32> to vector<8x64xf32>
    %12 = arith.addf %9, %11 : vector<8x64xf32>
    %cst_11 = arith.constant 0.000000e+00 : f32
    %13 = vector.broadcast %cst_11 : f32 to vector<8x64xf32>
    %14 = arith.maximumf %12, %13 : vector<8x64xf32>
    %c0_12 = arith.constant 0 : index
    %c0_13 = arith.constant 0 : index
    %15 = vector.load %arg6[%c0_12, %c0_13] : memref<1x64xf32, #tpu.memory_space<vmem>>, vector<1x64xf32>
    %16 = vector.broadcast %15 : vector<1x64xf32> to vector<8x64xf32>
    %17 = arith.mulf %14, %16 : vector<8x64xf32>
    %cst_14 = arith.constant dense<0.000000e+00> : vector<8xf32>
    %18 = vector.multi_reduction <add>, %17, %cst_14 [1] : vector<8x64xf32> to vector<8xf32>
    %19 = vector.shape_cast %18 : vector<8xf32> to vector<8x1xf32>
    %c0_15 = arith.constant 0 : index
    %c0_16 = arith.constant 0 : index
    %20 = vector.load %arg7[%c0_15, %c0_16] : memref<1x1xf32, #tpu.memory_space<vmem>>, vector<1x1xf32>
    %21 = vector.broadcast %20 : vector<1x1xf32> to vector<8x1xf32>
    %22 = arith.addf %19, %21 : vector<8x1xf32>
    %23 = arith.negf %22 : vector<8x1xf32>
    %24 = math.exp %23 : vector<8x1xf32>
    %cst_17 = arith.constant 1.000000e+00 : f32
    %25 = vector.broadcast %cst_17 : f32 to vector<8x1xf32>
    %26 = arith.addf %25, %24 : vector<8x1xf32>
    %27 = arith.divf %25, %26 : vector<8x1xf32>
    %c0_18 = arith.constant 0 : index
    %c0_19 = arith.constant 0 : index
    %28 = vector.load %arg8[%c0_18, %c0_19] : memref<8x1xf32, #tpu.memory_space<vmem>>, vector<8x1xf32>
    tpu.vector_store %arg8[%c0_18, %c0_19], %27 {strides = array<i32>} : memref<8x1xf32, #tpu.memory_space<vmem>>, vector<8x1xf32>,
    return
  }
  func.func @transform_0(%arg0: i32) -> (i32, i32) {
    %c0_i32 = arith.constant 0 : i32
    %c0_i32_0 = arith.constant 0 : i32
    return %arg0, %c0_i32 : i32, i32
  }
  func.func @transform_1(%arg0: i32) -> (i32, i32) {
    %c0_i32 = arith.constant 0 : i32
    %c0_i32_0 = arith.constant 0 : i32
    %c0_i32_1 = arith.constant 0 : i32
    return %c0_i32, %c0_i32_0 : i32, i32
  }
  func.func @transform_2(%arg0: i32) -> (i32, i32) {
    %c0_i32 = arith.constant 0 : i32
    %c0_i32_0 = arith.constant 0 : i32
    %c0_i32_1 = arith.constant 0 : i32
    return %c0_i32, %c0_i32_0 : i32, i32
  }
  func.func @transform_3(%arg0: i32) -> (i32, i32) {
    %c0_i32 = arith.constant 0 : i32
    %c0_i32_0 = arith.constant 0 : i32
    %c0_i32_1 = arith.constant 0 : i32
    return %c0_i32, %c0_i32_0 : i32, i32
  }
  func.func @transform_4(%arg0: i32) -> (i32, i32) {
    %c0_i32 = arith.constant 0 : i32
    %c0_i32_0 = arith.constant 0 : i32
    %c0_i32_1 = arith.constant 0 : i32
    return %c0_i32, %c0_i32_0 : i32, i32
  }
  func.func @transform_5(%arg0: i32) -> (i32, i32) {
    %c0_i32 = arith.constant 0 : i32
    %c0_i32_0 = arith.constant 0 : i32
    %c0_i32_1 = arith.constant 0 : i32
    return %c0_i32, %c0_i32_0 : i32, i32
  }
  func.func @transform_6(%arg0: i32) -> (i32, i32) {
    %c0_i32 = arith.constant 0 : i32
    %c0_i32_0 = arith.constant 0 : i32
    %c0_i32_1 = arith.constant 0 : i32
    return %c0_i32, %c0_i32_0 : i32, i32
  }
  func.func @transform_7(%arg0: i32) -> (i32, i32) {
    %c0_i32 = arith.constant 0 : i32
    %c0_i32_0 = arith.constant 0 : i32
    return %arg0, %c0_i32 : i32, i32
  }
}

</mosaic_0001>

<llo_original>
// kernel: contest_classifier_forward.1
$region0: #{contest_classifier_forward.1}
  #allocation0 [shape = 'u32[]', space=smem, size = 0x4, offset = 0x4, fixed_abs, tag = 'smem constant byte address 0x4 - core index']
  #allocation1 [shape = 'u32[144,128]{1,0:T(1,128)}', space=vmem, size = 0x12000, scoped, tag = 'internal scratch']
  #allocation2 [shape = 'f32[1,1]{1,0:T(1,128)S(1)}', space=vmem, size = 0x200, scoped, tag = 'scoped memory for contest_classifier_forward.1']
  %s0 = inlined_call_operand.hbm [shape: f32[8,32], index: 0, kind: input, shape index: {}]
  %s1 = inlined_call_operand.hbm [shape: f32[32,128], index: 1, kind: input, shape index: {}]
  %s2 = inlined_call_operand.hbm [shape: f32[1,128], index: 2, kind: input, shape index: {}]
  %s3 = inlined_call_operand.hbm [shape: f32[128,64], index: 3, kind: input, shape index: {}]
  %s4 = inlined_call_operand.hbm [shape: f32[1,64], index: 4, kind: input, shape index: {}]
  %s5 = inlined_call_operand.hbm [shape: f32[1,64], index: 5, kind: input, shape index: {}]
  %s6 = inlined_call_operand.<no memory space> [shape: f32[1,1], index: 6, kind: input, shape index: {}]
  %s7 = inlined_call_operand.hbm [shape: f32[8,1], index: 7, kind: output, shape index: {}]
  %s8 = sld [smem:[#allocation0]]
  $region62: #{contest_classifier_forward.1} parent=0
    _
  %s10 = ssub.s32 1, %s8
  %s11 = scalar_select 0, %s10, %s8
  %v12 = vstv %s6
  %13 = vst [vmem:[#allocation2] sm:$0x1] %v12
  $region1: #{contest_classifier_forward.1} parent=0
    #allocation3 [shape = 'u8[4096]{0}', space=vmem, size = 0x1000, scoped, tag = 'input window, operand 0, single buffered']
    #allocation4 [shape = 's32[1]{0}', space=sflag, size = 0x4, scoped, tag = 'scoped memory for contest_classifier_forward.1']
    #allocation5 [shape = 's32[1]{0}', space=sflag, size = 0x4, scoped, tag = 'scoped memory for contest_classifier_forward.1']
    #allocation6 [shape = 'u8[16384]{0}', space=vmem, size = 0x4000, scoped, tag = 'input window, operand 1, single buffered']
    #allocation7 [shape = 's32[1]{0}', space=sflag, size = 0x4, scoped, tag = 'scoped memory for contest_classifier_forward.1']
    #allocation8 [shape = 'u8[512]{0}', space=vmem, size = 0x400, scoped, tag = 'input window, operand 2, single buffered']
    #allocation9 [shape = 'u8[65536]{0}', space=vmem, size = 0x10000, scoped, tag = 'input window, operand 3, single buffered']
    #allocation10 [shape = 's32[1]{0}', space=sflag, size = 0x4, scoped, tag = 'scoped memory for contest_classifier_forward.1']
    #allocation11 [shape = 'u8[512]{0}', space=vmem, size = 0x400, scoped, tag = 'input window, operand 4, single buffered']
    #allocation12 [shape = 'u8[512]{0}', space=vmem, size = 0x400, scoped, tag = 'input window, operand 5, single buffered']
    #allocation13 [shape = 's32[1]{0}', space=sflag, size = 0x4, scoped, tag = 'scoped memory for contest_classifier_forward.1']
    #allocation14 [shape = 'u8[4096]{0}', space=vmem, size = 0x1000, scoped, tag = 'output window, operand 0, single buffered']
    %14 = vsyncpa [#allocation4], 0
    %15 = vsyncpa [#allocation7], 0
    %16 = vsyncpa [#allocation10], 0
    %17 = vsyncpa [#allocation13], 0
    %18 = vsyncpa [#allocation5], 0
    // Predicated region
    $region2: #{contest_classifier_forward.1} parent=1 // pred_check
      _
    $region3: #{contest_classifier_forward.1} parent=1 // pred_check_branch
      %20 = sbr.rel (0) target = $region5
    $region4: #{contest_classifier_forward.1} parent=1 // pred_region
      %s22 = ssub.s32 128, 128
      %23 = vsyncadd [#allocation4], %s22
      %s25 = sshll.u32 [#allocation3], 4
      %s26 = int_to_ptr.vmem [resolvable:$true] %s25
      %28 = dma.hbm_to_vmem [thread:$0]  %s0, 128, %s26, [#allocation4]
    $region5: #{contest_classifier_forward.1} parent=1 // pred_fallthru
      _
    // Predicated region
    $region6: #{contest_classifier_forward.1} parent=1 // pred_check
      _
    $region7: #{contest_classifier_forward.1} parent=1 // pred_check_branch
      %30 = sbr.rel (0) target = $region9
    $region8: #{contest_classifier_forward.1} parent=1 // pred_region
      %s32 = ssub.s32 512, 512
      %33 = vsyncadd [#allocation7], %s32
      %s34 = sshll.u32 [#allocation6], 4
      %s35 = int_to_ptr.vmem [resolvable:$true] %s34
      %40 = dma.hbm_to_vmem [thread:$0]  %s1, 512, %s35, [#allocation7], 128, 128, 8
    $region9: #{contest_classifier_forward.1} parent=1 // pred_fallthru
      _
    // Predicated region
    $region10: #{contest_classifier_forward.1} parent=1 // pred_check
      _
    $region11: #{contest_classifier_forward.1} parent=1 // pred_check_branch
      %42 = sbr.rel (0) target = $region13
    $region12: #{contest_classifier_forward.1} parent=1 // pred_region
      %s44 = ssub.s32 16, 16
      %45 = vsyncadd [#allocation7], %s44
      %s47 = sshll.u32 [#allocation8], 4
      %s48 = int_to_ptr.vmem [resolvable:$true] %s47
      %50 = dma.hbm_to_vmem [thread:$0]  %s2, 16, %s48, [#allocation7]
    $region13: #{contest_classifier_forward.1} parent=1 // pred_fallthru
      _
    // Predicated region
    $region14: #{contest_classifier_forward.1} parent=1 // pred_check
      _
    $region15: #{contest_classifier_forward.1} parent=1 // pred_check_branch
      %52 = sbr.rel (0) target = $region17
    $region16: #{contest_classifier_forward.1} parent=1 // pred_region
      %s54 = ssub.s32 2048, 2048
      %55 = vsyncadd [#allocation10], %s54
      %s56 = sshll.u32 [#allocation9], 4
      %s57 = int_to_ptr.vmem [resolvable:$true] %s56
      %62 = dma.hbm_to_vmem [thread:$0]  %s3, 2048, %s57, [#allocation10], 128, 128, 8
    $region17: #{contest_classifier_forward.1} parent=1 // pred_fallthru
      _
    // Predicated region
    $region18: #{contest_classifier_forward.1} parent=1 // pred_check
      _
    $region19: #{contest_classifier_forward.1} parent=1 // pred_check_branch
      %64 = sbr.rel (0) target = $region21
    $region20: #{contest_classifier_forward.1} parent=1 // pred_region
      %s66 = ssub.s32 16, 16
      %67 = vsyncadd [#allocation10], %s66
      %s69 = sshll.u32 [#allocation11], 4
      %s70 = int_to_ptr.vmem [resolvable:$true] %s69
      %72 = dma.hbm_to_vmem [thread:$0]  %s4, 16, %s70, [#allocation10]
    $region21: #{contest_classifier_forward.1} parent=1 // pred_fallthru
      _
    // Predicated region
    $region22: #{contest_classifier_forward.1} parent=1 // pred_check
      _
    $region23: #{contest_classifier_forward.1} parent=1 // pred_check_branch
      %74 = sbr.rel (0) target = $region25
    $region24: #{contest_classifier_forward.1} parent=1 // pred_region
      %s76 = ssub.s32 16, 16
      %77 = vsyncadd [#allocation13], %s76
      %s79 = sshll.u32 [#allocation12], 4
      %s80 = int_to_ptr.vmem [resolvable:$true] %s79
      %82 = dma.hbm_to_vmem [thread:$0]  %s5, 16, %s80, [#allocation13]
    $region25: #{contest_classifier_forward.1} parent=1 // pred_fallthru
      _
    // Predicated region
    $region26: #{contest_classifier_forward.1} parent=1 // pred_check
      _
    $region27: #{contest_classifier_forward.1} parent=1 // pred_check_branch
      %84 = sbr.rel (0) target = $region29
    $region28: #{contest_classifier_forward.1} parent=1 // pred_region
      _
    $region29: #{contest_classifier_forward.1} parent=1 // pred_fallthru
      _
    // Predicated region
    $region30: #{contest_classifier_forward.1} parent=1 // pred_check
      _
    $region31: #{contest_classifier_forward.1} parent=1 // pred_check_branch
      %86 = sbr.rel (0) target = $region33
    $region32: #{contest_classifier_forward.1} parent=1 // pred_region
      %87 = dma.done [#allocation4], 128
    $region33: #{contest_classifier_forward.1} parent=1 // pred_fallthru
      _
    // Predicated region
    $region34: #{contest_classifier_forward.1} parent=1 // pred_check
      _
    $region35: #{contest_classifier_forward.1} parent=1 // pred_check_branch
      %89 = sbr.rel (0) target = $region37
    $region36: #{contest_classifier_forward.1} parent=1 // pred_region
      %90 = dma.done [#allocation7], 512
    $region37: #{contest_classifier_forward.1} parent=1 // pred_fallthru
      _
    // Predicated region
    $region38: #{contest_classifier_forward.1} parent=1 // pred_check
      _
    $region39: #{contest_classifier_forward.1} parent=1 // pred_check_branch
      %92 = sbr.rel (0) target = $region41
    $region40: #{contest_classifier_forward.1} parent=1 // pred_region
      %93 = dma.done [#allocation7], 16
    $region41: #{contest_classifier_forward.1} parent=1 // pred_fallthru
      _
    // Predicated region
    $region42: #{contest_classifier_forward.1} parent=1 // pred_check
      _
    $region43: #{contest_classifier_forward.1} parent=1 // pred_check_branch
      %95 = sbr.rel (0) target = $region45
    $region44: #{contest_classifier_forward.1} parent=1 // pred_region
      %96 = dma.done [#allocation10], 2048
    $region45: #{contest_classifier_forward.1} parent=1 // pred_fallthru
      _
    // Predicated region
    $region46: #{contest_classifier_forward.1} parent=1 // pred_check
      _
    $region47: #{contest_classifier_forward.1} parent=1 // pred_check_branch
      %98 = sbr.rel (0) target = $region49
    $region48: #{contest_classifier_forward.1} parent=1 // pred_region
      %99 = dma.done [#allocation10], 16
    $region49: #{contest_classifier_forward.1} parent=1 // pred_fallthru
      _
    // Predicated region
    $region50: #{contest_classifier_forward.1} parent=1 // pred_check
      _
    $region51: #{contest_classifier_forward.1} parent=1 // pred_check_branch
      %101 = sbr.rel (0) target = $region53
    $region52: #{contest_classifier_forward.1} parent=1 // pred_region
      %102 = dma.done [#allocation13], 16
    $region53: #{contest_classifier_forward.1} parent=1 // pred_fallthru
      _
    %v103 = vld [vmem:[#allocation3] sm:$0xff]
    %v104 = vld [vmem:[#allocation6] sm:$0xff]
    %v105 = vld [vmem:[#allocation6 + $0x8] sm:$0xff]
    %v106 = vld [vmem:[#allocation6 + $0x10] sm:$0xff]
    %v107 = vld [vmem:[#allocation6 + $0x18] sm:$0xff]
    %v108 = vld [vmem:[#allocation8] sm:$0x1]
    %v110 = vlaneseq
    %v111 = vshrl.u32 %v110, 7
    %v112 = vsub.s32 0, %v111
    %v113 = vrot.slane %v108, %v112
    %vm115 = vcmask 261120
    %v117 = vsel %vm115, %v103, 0
    %119 = vmatprep.subr.mxu0 0.0
    %120 = vmatpush1.msra.mxu0 %v104
    %121 = vmatprep.subr.mxu0 0.0
    %122 = vmatpush1.msra.mxu0 %v105
    %123 = vmatprep.subr.mxu0 0.0
    %124 = vmatpush1.msra.mxu0 %v106
    %125 = vmatprep.subr.mxu0 0.0
    %126 = vmatpush1.msra.mxu0 %v107
    %127 = vmatprep.subr.mxu0 0.0
    %128 = vmatpush1.msra.mxu0 0.0
    %129 = vmatprep.subr.mxu0 0.0
    %130 = vmatpush1.msra.mxu0 0.0
    %131 = vmatprep.subr.mxu0 0.0
    %132 = vmatpush1.msra.mxu0 0.0
    %133 = vmatprep.subr.mxu0 0.0
    %134 = vmatpush1.msra.mxu0 0.0
    %135 = vmatprep.subr.mxu0 0.0
    %136 = vmatpush1.msra.mxu0 0.0
    %137 = vmatprep.subr.mxu0 0.0
    %138 = vmatpush1.msra.mxu0 0.0
    %139 = vmatprep.subr.mxu0 0.0
    %140 = vmatpush1.msra.mxu0 0.0
    %141 = vmatprep.subr.mxu0 0.0
    %142 = vmatpush1.msra.mxu0 0.0
    %143 = vmatprep.subr.mxu0 0.0
    %144 = vmatpush1.msra.mxu0 0.0
    %145 = vmatprep.subr.mxu0 0.0
    %146 = vmatpush1.msra.mxu0 0.0
    %147 = vmatprep.subr.mxu0 0.0
    %148 = vmatpush1.msra.mxu0 0.0
    %149 = vmatprep.subr.mxu0 0.0
    %150 = vmatpush1.msra.mxu0 0.0
    %151 = vmatprep.subr.mxu0 0.0
    %152 = vmatpush1.msra.mxu0 0.0
    %153 = vmatprep.subr.mxu0 0.0
    %154 = vmatpush1.msra.mxu0 0.0
    %155 = vmatprep.subr.mxu0 0.0
    %156 = vmatpush1.msra.mxu0 0.0
    %157 = vmatprep.subr.mxu0 0.0
    %158 = vmatpush1.msra.mxu0 0.0
    %159 = vmatprep.subr.mxu0 0.0
    %160 = vmatpush1.msra.mxu0 0.0
    %161 = vmatprep.subr.mxu0 0.0
    %162 = vmatpush1.msra.mxu0 0.0
    %163 = vmatprep.subr.mxu0 0.0
    %164 = vmatpush1.msra.mxu0 0.0
    %165 = vmatprep.subr.mxu0 0.0
    %166 = vmatpush1.msra.mxu0 0.0
    %167 = vmatprep.subr.mxu0 0.0
    %168 = vmatpush1.msra.mxu0 0.0
    %169 = vmatprep.subr.mxu0 0.0
    %170 = vmatpush1.msra.mxu0 0.0
    %171 = vmatprep.subr.mxu0 0.0
    %172 = vmatpush1.msra.mxu0 0.0
    %173 = vmatprep.subr.mxu0 0.0
    %174 = vmatpush1.msra.mxu0 0.0
    %175 = vmatprep.subr.mxu0 0.0
    %176 = vmatpush1.msra.mxu0 0.0
    %177 = vmatprep.subr.mxu0 0.0
    %178 = vmatpush1.msra.mxu0 0.0
    %179 = vmatprep.subr.mxu0 0.0
    %180 = vmatpush1.msra.mxu0 0.0
    %181 = vmatprep.subr.mxu0 0.0
    %182 = vmatpush1.msra.mxu0 0.0
    %183 = vmatprep.mubr.f32.mxu0 0.0
    %184 = vmatmul.mubr.f32.gmra.mrb[0].mxu0 %v117
    %v185 = vpop.f32.mrb[0].mxu0
    %v186 = vadd.f32 %v113, %v185
    %v187 = vpop.f32.mrb[0].mxu0
    %188 = vdwg.mxu0
    %v189 = vmax.f32 %v186, 0.0
    %v190 = vld [vmem:[#allocation9] sm:$0xff]
    %v191 = vld [vmem:[#allocation9 + $0x8] sm:$0xff]
    %v192 = vld [vmem:[#allocation9 + $0x10] sm:$0xff]
    %v193 = vld [vmem:[#allocation9 + $0x18] sm:$0xff]
    %v194 = vld [vmem:[#allocation9 + $0x20] sm:$0xff]
    %v195 = vld [vmem:[#allocation9 + $0x28] sm:$0xff]
    %v196 = vld [vmem:[#allocation9 + $0x30] sm:$0xff]
    %v197 = vld [vmem:[#allocation9 + $0x38] sm:$0xff]
    %v198 = vld [vmem:[#allocation9 + $0x40] sm:$0xff]
    %v199 = vld [vmem:[#allocation9 + $0x48] sm:$0xff]
    %v200 = vld [vmem:[#allocation9 + $0x50] sm:$0xff]
    %v201 = vld [vmem:[#allocation9 + $0x58] sm:$0xff]
    %v202 = vld [vmem:[#allocation9 + $0x60] sm:$0xff]
    %v203 = vld [vmem:[#allocation9 + $0x68] sm:$0xff]
    %v204 = vld [vmem:[#allocation9 + $0x70] sm:$0xff]
    %v205 = vld [vmem:[#allocation9 + $0x78] sm:$0xff]
    %v206 = vld [vmem:[#allocation11] sm:$0x1]
    %v208 = vlaneseq
    %v209 = vshrl.u32 %v208, 7
    %v210 = vsub.s32 0, %v209
    %v211 = vrot.slane %v206, %v210
    %213 = vmatprep.subr.mxu0 0.0
    %214 = vmatpush1.msra.mxu0 %v190
    %215 = vmatprep.subr.mxu0 0.0
    %216 = vmatpush1.msra.mxu0 %v191
    %217 = vmatprep.subr.mxu0 0.0
    %218 = vmatpush1.msra.mxu0 %v192
    %219 = vmatprep.subr.mxu0 0.0
    %220 = vmatpush1.msra.mxu0 %v193
    %221 = vmatprep.subr.mxu0 0.0
    %222 = vmatpush1.msra.mxu0 %v194
    %223 = vmatprep.subr.mxu0 0.0
    %224 = vmatpush1.msra.mxu0 %v195
    %225 = vmatprep.subr.mxu0 0.0
    %226 = vmatpush1.msra.mxu0 %v196
    %227 = vmatprep.subr.mxu0 0.0
    %228 = vmatpush1.msra.mxu0 %v197
    %229 = vmatprep.subr.mxu0 0.0
    %230 = vmatpush1.msra.mxu0 %v198
    %231 = vmatprep.subr.mxu0 0.0
    %232 = vmatpush1.msra.mxu0 %v199
    %233 = vmatprep.subr.mxu0 0.0
    %234 = vmatpush1.msra.mxu0 %v200
    %235 = vmatprep.subr.mxu0 0.0
    %236 = vmatpush1.msra.mxu0 %v201
    %237 = vmatprep.subr.mxu0 0.0
    %238 = vmatpush1.msra.mxu0 %v202
    %239 = vmatprep.subr.mxu0 0.0
    %240 = vmatpush1.msra.mxu0 %v203
    %241 = vmatprep.subr.mxu0 0.0
    %242 = vmatpush1.msra.mxu0 %v204
    %243 = vmatprep.subr.mxu0 0.0
    %244 = vmatpush1.msra.mxu0 %v205
    %245 = vmatprep.subr.mxu0 0.0
    %246 = vmatpush1.msra.mxu0 0.0
    %247 = vmatprep.subr.mxu0 0.0
    %248 = vmatpush1.msra.mxu0 0.0
    %249 = vmatprep.subr.mxu0 0.0
    %250 = vmatpush1.msra.mxu0 0.0
    %251 = vmatprep.subr.mxu0 0.0
    %252 = vmatpush1.msra.mxu0 0.0
    %253 = vmatprep.subr.mxu0 0.0
    %254 = vmatpush1.msra.mxu0 0.0
    %255 = vmatprep.subr.mxu0 0.0
    %256 = vmatpush1.msra.mxu0 0.0
    %257 = vmatprep.subr.mxu0 0.0
    %258 = vmatpush1.msra.mxu0 0.0
    %259 = vmatprep.subr.mxu0 0.0
    %260 = vmatpush1.msra.mxu0 0.0
    %261 = vmatprep.subr.mxu0 0.0
    %262 = vmatpush1.msra.mxu0 0.0
    %263 = vmatprep.subr.mxu0 0.0
    %264 = vmatpush1.msra.mxu0 0.0
    %265 = vmatprep.subr.mxu0 0.0
    %266 = vmatpush1.msra.mxu0 0.0
    %267 = vmatprep.subr.mxu0 0.0
    %268 = vmatpush1.msra.mxu0 0.0
    %269 = vmatprep.subr.mxu0 0.0
    %270 = vmatpush1.msra.mxu0 0.0
    %271 = vmatprep.subr.mxu0 0.0
    %272 = vmatpush1.msra.mxu0 0.0
    %273 = vmatprep.subr.mxu0 0.0
    %274 = vmatpush1.msra.mxu0 0.0
    %275 = vmatprep.subr.mxu0 0.0
    %276 = vmatpush1.msra.mxu0 0.0
    %277 = vmatprep.mubr.f32.mxu0 0.0
    %278 = vmatmul.mubr.f32.gmra.mrb[0].mxu0 %v189
    %v279 = vpop.f32.mrb[0].mxu0
    %v280 = vadd.f32 %v211, %v279
    %v281 = vpop.f32.mrb[0].mxu0
    %282 = vdwg.mxu0
    %v283 = vmax.f32 %v280, 0.0
    %v284 = vld [vmem:[#allocation12] sm:$0x1]
    %v286 = vlaneseq
    %v287 = vshrl.u32 %v286, 7
    %v288 = vsub.s32 0, %v287
    %v289 = vrot.slane %v284, %v288
    %v291 = vmul.f32 %v283, %v289
    %vm292 = vcmask 523264
    %v293 = vsel %vm292, %v291, 0.0
    %294 = vadd.xlane.f32.xlu0 %v293
    %v295 = vpop.xlane.xlu0 %294
    %v296 = vld [vmem:[#allocation2] sm:$0x1]
    %v298 = vlaneseq
    %v299 = vshrl.u32 %v298, 7
    %v300 = vsub.s32 0, %v299
    %v301 = vrot.slane %v296, %v300
    %v303 = vadd.f32 %v295, %v301
    %v304 = vxor.u32 %v303, 2147483648
    %v305 = vmul.f32 %v304, 1.442695
    %v306 = vpow.pop %v305
    %v307 = vadd.f32 %v306, 1.0
    %v308 = vrcp.pop %v307
    %v309 = vmul.f32 1.0, %v308
    %vm310 = vcmask 7168
    %311 = vst.msk [vmem:[#allocation14] sm:$0xff] %vm310, %v309
    // Predicated region
    $region54: #{contest_classifier_forward.1} parent=1 // pred_check
      _
    $region55: #{contest_classifier_forward.1} parent=1 // pred_check_branch
      %313 = sbr.rel (0) target = $region57
    $region56: #{contest_classifier_forward.1} parent=1 // pred_region
      %s315 = ssub.s32 128, 128
      %316 = vsyncadd [#allocation5], %s315
      %s318 = sshll.u32 [#allocation14], 4
      %s319 = int_to_ptr.vmem [resolvable:$true] %s318
      %321 = dma.vmem_to_hbm [thread:$0]  %s319, 128, %s7, [#allocation5]
    $region57: #{contest_classifier_forward.1} parent=1 // pred_fallthru
      _
    // Predicated region
    $region58: #{contest_classifier_forward.1} parent=1 // pred_check
      _
    $region59: #{contest_classifier_forward.1} parent=1 // pred_check_branch
      %323 = sbr.rel (0) target = $region61
    $region60: #{contest_classifier_forward.1} parent=1 // pred_region
      %324 = dma.done [#allocation5], 128
    $region61: #{contest_classifier_forward.1} parent=1 // pred_fallthru
      _
    %325 = vsyncpa [#allocation4], 1
    %326 = vsyncpa [#allocation7], 1
    %327 = vsyncpa [#allocation10], 1
    %328 = vsyncpa [#allocation13], 1
    %329 = vsyncpa [#allocation5], 1

</llo_original>
